<compile_context>
chip_gen: v5e
topology: v5e:2x2
jax: 0.10.0
libtpu: 0.0.40
codegen_flags: <defaults>
</compile_context>

<pallas_src>
import jax
import jax.numpy as jnp
from jax.experimental import pallas as pl
from jax.experimental.pallas import tpu as pltpu


# ----------------------------- small helpers --------------------------------

def _round_up(x, m):
    return ((x + m - 1) // m) * m


def _round_down(x, m):
    return (x // m) * m


def _choose_packing(embed_dim, num_actions, b_flat):
    """Pick the input pack factor P and output fold factor G.

    P rows fold into one 128-lane input row; G packed rows' results fold into
    one 128-lane output row.  Both shrink (powers of two) until P*G divides
    b_flat so every wrapper reshape is a zero-copy bitcast (no jnp.pad).
    """
    if 0 < embed_dim <= 128 and 128 % embed_dim == 0:
        p = 128 // embed_dim
    else:
        p = 1
    while p > 1 and b_flat % p:
        p //= 2
    np_ = p * num_actions
    if 0 < np_ <= 128 and 128 % np_ == 0:
        g = 128 // np_
    else:
        g = 1
    while g > 1 and b_flat % (p * g):
        g //= 2
    return p, g


def _pack_params(w_t, b_f32, p, g):
    """Block-diagonal packed weight (P*E, P*A) and lane-dense bias (1, G*P*A)."""
    e, a = w_t.shape
    if p > 1:
        w_packed = jnp.einsum("pq,ea->peqa", jnp.eye(p, dtype=jnp.float32), w_t)
        w_packed = w_packed.reshape(p * e, p * a)
    else:
        w_packed = w_t
    b_packed = jnp.tile(b_f32, p * g).reshape(1, g * p * a)
    return w_packed, b_packed


def pack_reward_params(weight, bias, *, embed_dim, num_actions, num_rows=None):
    """Precompute packed params once (hoist out of the per-step call).

    num_rows: flattened row count the caller will use (so the packing matches
    what mlp_reward_fn picks).  None assumes a fully aligned batch.
    """
    w_t = weight.astype(jnp.float32).T
    b_f32 = bias.astype(jnp.float32)
    p, g = _choose_packing(embed_dim, num_actions, 0 if num_rows is None else num_rows)
    w_packed, b_packed = _pack_params(w_t, b_f32, p, g)
    return {"p": p, "g": g, "w_packed": w_packed, "b_packed": b_packed,
            "w_t": w_t, "b_f32": b_f32}


_VMEM_BUDGET = 12 * 1024 * 1024   # stay under v5e's 16 MiB scoped-VMEM default


def _choose_tile_super_rows(r_total, s_rows, block_rows,
                            in_bytes_per_sr, out_bytes_per_sr):
    """Tile size in 'super rows' (one super row = s_rows flattened rows)."""
    req = max(8, _round_down(max(block_rows // max(s_rows, 1), 8), 8))
    # cap so input+output double-buffers stay inside the scoped-VMEM default
    cap = _round_down(_VMEM_BUDGET // (2 * (in_bytes_per_sr + out_bytes_per_sr)), 8)
    req = max(8, min(req, max(cap, 8)))
    if r_total <= req:
        return r_total                     # single tile covers everything
    tmg = req
    # v7x megacore: prefer >= 8 tiles on the "parallel" axis, but never shrink a
    # tile below ~4096 flattened rows (keeps ~0.35us/step overhead < ~15%).
    min_tmg = max(8, _round_down(max(4096 // max(s_rows, 1), 8), 8))
    if r_total // tmg < 8 and tmg > min_tmg:
        tmg = max(min_tmg, _round_down(r_total // 8, 8))
    return tmg


# ------------------------------- kernels -------------------------------------

def _reward_kernel_folded(x_ref, w_ref, b_ref, o_ref):
    """Lane-dense in AND out.

    x_ref: (tmg, G, Kp)  activations, native dtype (cast to f32 in-kernel)
    w_ref: (Kp, Np)      block-diagonal packed weight, f32
    b_ref: (1, G*Np)     lane-dense packed bias, f32
    o_ref: (tmg, G*Np)   lane-dense output, f32 (unmasked 128-lane stores)
    """
    w = w_ref[...]
    g_fold = x_ref.shape[1]
    parts = [
        jnp.dot(x_ref[:, g, :].astype(jnp.float32), w,
                preferred_element_type=jnp.float32)
        for g in range(g_fold)
    ]
    acc = jnp.concatenate(parts, axis=-1) if g_fold > 1 else parts[0]
    o_ref[...] = (acc + b_ref[...]).astype(o_ref.dtype)


def _reward_kernel_plain(x_ref, w_ref, b_ref, o_ref):
    """Fallback (no output fold): x_ref (tm, Kp), o_ref (tm, Np)."""
    acc = jnp.dot(x_ref[...].astype(jnp.float32), w_ref[...],
                  preferred_element_type=jnp.float32)
    o_ref[...] = (acc + b_ref[...]).astype(o_ref.dtype)


# ------------------------------- wrapper --------------------------------------

def mlp_reward_fn(x, weight, bias, *, embed_dim, num_actions,
                  block_rows=16384, use_pallas=None, packed=None):
    """Pallas equivalent of MLPRewardFn.forward.

    x:          any shape flattening to (-1, embed_dim); any float dtype
    weight:     (num_actions, embed_dim)   -- PyTorch nn.Linear layout
    bias:       (num_actions,)
    block_rows: Pallas tile size in flattened rows
    packed:     optional output of pack_reward_params() (hoisted packing)
    returns     (B_flat, num_actions) float32
    """
    x2d = x.reshape(-1, embed_dim)              # free view, native dtype
    b_flat = x2d.shape[0]

    if packed is not None:
        w_t, b_f32 = packed["w_t"], packed["b_f32"]
    else:
        w_t = weight.astype(jnp.float32).T
        b_f32 = bias.astype(jnp.float32)

    def xla_path(rows):                         # exact same f32 math, XLA-fused
        return rows.astype(jnp.float32) @ w_t + b_f32[None, :]

    if b_flat == 0:
        return jnp.zeros((0, num_actions), jnp.float32)
    if use_pallas is None:
        # Pallas launch + per-step overhead dominates sub-microsecond GEMMs.
        use_pallas = b_flat >= 2048
    if not use_pallas:
        return xla_path(x2d)

    p, g = _choose_packing(embed_dim, num_actions, b_flat)
    kp, np_, s = p * embed_dim, p * num_actions, p * g
    r_total = b_flat // s                       # s divides b_flat by construction

    itemsize = x2d.dtype.itemsize
    sub = 8 * max(1, 4 // itemsize)             # sublane tiling multiple
    if g > 1:
        in_bytes = _round_up(g, sub) * _round_up(kp, 128) * itemsize
        out_bytes = _round_up(g * np_, 128) * 4
    else:
        in_bytes = _round_up(kp, 128) * itemsize
        out_bytes = _round_up(np_, 128) * 4

    tmg = _choose_tile_super_rows(r_total, s, block_rows, in_bytes, out_bytes)
    n_tiles = r_total // tmg
    r_main = n_tiles * tmg
    b_main = r_main * s

    if packed is not None and packed["p"] == p and packed["g"] == g:
        w_packed, b_packed = packed["w_packed"], packed["b_packed"]
    else:
        w_packed, b_packed = _pack_params(w_t, b_f32, p, g)

    if g > 1:
        # zero-copy bitcast: (b_flat, E) -> (r_total, G, Kp)
        x_in = x2d.reshape(r_total, g, kp)
        kernel = _reward_kernel_folded
        in_specs = [
            pl.BlockSpec((tmg, g, kp), lambda i: (i, 0, 0)),   # streamed acts
            pl.BlockSpec((kp, np_), lambda i: (0, 0)),         # resident weight
            pl.BlockSpec((1, g * np_), lambda i: (0, 0)),      # resident bias
        ]
        out_specs = pl.BlockSpec((tmg, g * np_), lambda i: (i, 0))
        out_shape = jax.ShapeDtypeStruct((r_main, g * np_), jnp.float32)
    else:
        # zero-copy bitcast: (b_flat, E) -> (r_total, Kp)
        x_in = x2d.reshape(r_total, kp)
        kernel = _reward_kernel_plain
        in_specs = [
            pl.BlockSpec((tmg, kp), lambda i: (i, 0)),
            pl.BlockSpec((kp, np_), lambda i: (0, 0)),
            pl.BlockSpec((1, np_), lambda i: (0, 0)),
        ]
        out_specs = pl.BlockSpec((tmg, np_), lambda i: (i, 0))
        out_shape = jax.ShapeDtypeStruct((r_main, np_), jnp.float32)

    out_main = pl.pallas_call(
        kernel,
        out_shape=out_shape,
        grid_spec=pl.GridSpec(
            grid=(n_tiles,),
            in_specs=in_specs,
            out_specs=out_specs,
        ),
        compiler_params=pltpu.CompilerParams(
            # independent batch tiles -> megacore sharding on v7x
            dimension_semantics=("parallel",),
        ),
    )(x_in, w_packed, b_packed)

    out_main = out_main.reshape(b_main, num_actions)   # free contiguous reshape
    if b_main == b_flat:
        return out_main
    # Tile-remainder (< one tile of rows): tiny fused XLA matmul, slice is cheap.
    out_tail = xla_path(x2d[b_main:])
    return jnp.concatenate([out_main, out_tail], axis=0)


# --------------------------------- demo ---------------------------------------

if __name__ == "__main__":
    embed_dim = 32
    num_actions = 4

    key = jax.random.PRNGKey(0)
    kx1, kx2, kx3, kw, kb = jax.random.split(key, 5)

    # nn.Linear(embed_dim, num_actions)-shaped synthetic parameters.
    bound = 1.0 / (embed_dim ** 0.5)
    weight = jax.random.uniform(kw, (num_actions, embed_dim),
                                minval=-bound, maxval=bound, dtype=jnp.float32)
    bias = jax.random.uniform(kb, (num_actions,),
                              minval=-bound, maxval=bound, dtype=jnp.float32)

    # Case 1: tiny input (batch=2, seq=4) -> auto XLA fast path.
    x_small = jax.random.normal(kx1, (2, 4, embed_dim), dtype=jnp.float32)
    out_small = mlp_reward_fn(x_small, weight, bias,
                              embed_dim=embed_dim, num_actions=num_actions)
    jax.block_until_ready(out_small)
    ref_small = x_small.reshape(-1, embed_dim) @ weight.T + bias
    assert out_small.shape == (8, num_actions)
    assert jnp.allclose(out_small, ref_small, atol=1e-4, rtol=1e-4)

    # Case 2: force the Pallas path with fully lane-dense in/out packing
    # (P=4, G=8): 4*200 = 800 rows -> 25 super-rows, 3 tiles of 8 plus a 32-row
    # XLA tail.  Packed params are hoisted via pack_reward_params.
    x_big = jax.random.normal(kx2, (4, 200, embed_dim), dtype=jnp.float32)
    packed_params = pack_reward_params(weight, bias, embed_dim=embed_dim,
                                       num_actions=num_actions,
                                       num_rows=x_big.size // embed_dim)
    out_big = mlp_reward_fn(x_big, weight, bias,
                            embed_dim=embed_dim, num_actions=num_actions,
                            block_rows=256, use_pallas=True,
                            packed=packed_params)
    jax.block_until_ready(out_big)
    ref_big = x_big.reshape(-1, embed_dim) @ weight.T + bias
    assert out_big.shape == (4 * 200, num_actions)
    assert jnp.allclose(out_big, ref_big, atol=1e-4, rtol=1e-4)

    # Case 3: odd row count (3*111 = 333) -> packing degrades gracefully to
    # P=1, G=1 (plain kernel) with zero copies; tail rows go through XLA.
    x_odd = jax.random.normal(kx3, (3, 111, embed_dim), dtype=jnp.float32)
    out_odd = mlp_reward_fn(x_odd, weight, bias,
                            embed_dim=embed_dim, num_actions=num_actions,
                            block_rows=256, use_pallas=True)
    jax.block_until_ready(out_odd)
    ref_odd = x_odd.reshape(-1, embed_dim) @ weight.T + bias
    assert out_odd.shape == (3 * 111, num_actions)
    assert jnp.allclose(out_odd, ref_odd, atol=1e-4, rtol=1e-4)

    print("KERNEL_OK")
</pallas_src>

<mosaic_0001>
module attributes {stable_mosaic.version = 11 : i64} {
  func.func @_reward_kernel_folded(%arg0: i32, %arg1: memref<8x8x128xf32, #tpu.memory_space<vmem>>, %arg2: memref<128x16xf32, #tpu.memory_space<vmem>>, %arg3: memref<1x128xf32, #tpu.memory_space<vmem>>, %arg4: memref<8x128xf32, #tpu.memory_space<vmem>>) attributes {dimension_semantics = [#tpu.dimension_semantics<parallel>], iteration_bounds = array<i64: 3>, scalar_prefetch = 0 : i64, scratch_operands = 0 : i64, tpu.core_type = #tpu.core_type<tc>, window_params = [{transform_indices = @transform_0, window_bounds = array<i64: 8, 8, 128>}, {pipeline_mode = #tpu.pipeline_mode<synchronous>, transform_indices = @transform_1, window_bounds = array<i64: 128, 16>}, {pipeline_mode = #tpu.pipeline_mode<synchronous>, transform_indices = @transform_2, window_bounds = array<i64: 1, 128>}, {transform_indices = @transform_3, window_bounds = array<i64: 8, 128>}]} {
    %c0 = arith.constant 0 : index
    %c0_0 = arith.constant 0 : index
    %0 = vector.load %arg2[%c0, %c0_0] : memref<128x16xf32, #tpu.memory_space<vmem>>, vector<128x16xf32>
    %c0_1 = arith.constant 0 : index
    %c0_2 = arith.constant 0 : index
    %c0_3 = arith.constant 0 : index
    %1 = vector.load %arg1[%c0_1, %c0_2, %c0_3] : memref<8x8x128xf32, #tpu.memory_space<vmem>>, vector<8x1x128xf32>
    %2 = vector.shape_cast %1 : vector<8x1x128xf32> to vector<8x128xf32>
    %cst = arith.constant dense<0.000000e+00> : vector<8x16xf32>
    %3 = tpu.matmul %2, %0, %cst {dimension_numbers = #tpu.dot_dimension_numbers<[1], [0], [0], [1], [0, 0, 1, 1], [], []>} : vector<8x128xf32>, vector<128x16xf32>, vector<8x16xf32> -> vector<8x16xf32>
    %c0_4 = arith.constant 0 : index
    %c1 = arith.constant 1 : index
    %c0_5 = arith.constant 0 : index
    %4 = vector.load %arg1[%c0_4, %c1, %c0_5] : memref<8x8x128xf32, #tpu.memory_space<vmem>>, vector<8x1x128xf32>
    %5 = vector.shape_cast %4 : vector<8x1x128xf32> to vector<8x128xf32>
    %cst_6 = arith.constant dense<0.000000e+00> : vector<8x16xf32>
    %6 = tpu.matmul %5, %0, %cst_6 {dimension_numbers = #tpu.dot_dimension_numbers<[1], [0], [0], [1], [0, 0, 1, 1], [], []>} : vector<8x128xf32>, vector<128x16xf32>, vector<8x16xf32> -> vector<8x16xf32>
    %c0_7 = arith.constant 0 : index
    %c2 = arith.constant 2 : index
    %c0_8 = arith.constant 0 : index
    %7 = vector.load %arg1[%c0_7, %c2, %c0_8] : memref<8x8x128xf32, #tpu.memory_space<vmem>>, vector<8x1x128xf32>
    %8 = vector.shape_cast %7 : vector<8x1x128xf32> to vector<8x128xf32>
    %cst_9 = arith.constant dense<0.000000e+00> : vector<8x16xf32>
    %9 = tpu.matmul %8, %0, %cst_9 {dimension_numbers = #tpu.dot_dimension_numbers<[1], [0], [0], [1], [0, 0, 1, 1], [], []>} : vector<8x128xf32>, vector<128x16xf32>, vector<8x16xf32> -> vector<8x16xf32>
    %c0_10 = arith.constant 0 : index
    %c3 = arith.constant 3 : index
    %c0_11 = arith.constant 0 : index
    %10 = vector.load %arg1[%c0_10, %c3, %c0_11] : memref<8x8x128xf32, #tpu.memory_space<vmem>>, vector<8x1x128xf32>
    %11 = vector.shape_cast %10 : vector<8x1x128xf32> to vector<8x128xf32>
    %cst_12 = arith.constant dense<0.000000e+00> : vector<8x16xf32>
    %12 = tpu.matmul %11, %0, %cst_12 {dimension_numbers = #tpu.dot_dimension_numbers<[1], [0], [0], [1], [0, 0, 1, 1], [], []>} : vector<8x128xf32>, vector<128x16xf32>, vector<8x16xf32> -> vector<8x16xf32>
    %c0_13 = arith.constant 0 : index
    %c4 = arith.constant 4 : index
    %c0_14 = arith.constant 0 : index
    %13 = vector.load %arg1[%c0_13, %c4, %c0_14] : memref<8x8x128xf32, #tpu.memory_space<vmem>>, vector<8x1x128xf32>
    %14 = vector.shape_cast %13 : vector<8x1x128xf32> to vector<8x128xf32>
    %cst_15 = arith.constant dense<0.000000e+00> : vector<8x16xf32>
    %15 = tpu.matmul %14, %0, %cst_15 {dimension_numbers = #tpu.dot_dimension_numbers<[1], [0], [0], [1], [0, 0, 1, 1], [], []>} : vector<8x128xf32>, vector<128x16xf32>, vector<8x16xf32> -> vector<8x16xf32>
    %c0_16 = arith.constant 0 : index
    %c5 = arith.constant 5 : index
    %c0_17 = arith.constant 0 : index
    %16 = vector.load %arg1[%c0_16, %c5, %c0_17] : memref<8x8x128xf32, #tpu.memory_space<vmem>>, vector<8x1x128xf32>
    %17 = vector.shape_cast %16 : vector<8x1x128xf32> to vector<8x128xf32>
    %cst_18 = arith.constant dense<0.000000e+00> : vector<8x16xf32>
    %18 = tpu.matmul %17, %0, %cst_18 {dimension_numbers = #tpu.dot_dimension_numbers<[1], [0], [0], [1], [0, 0, 1, 1], [], []>} : vector<8x128xf32>, vector<128x16xf32>, vector<8x16xf32> -> vector<8x16xf32>
    %c0_19 = arith.constant 0 : index
    %c6 = arith.constant 6 : index
    %c0_20 = arith.constant 0 : index
    %19 = vector.load %arg1[%c0_19, %c6, %c0_20] : memref<8x8x128xf32, #tpu.memory_space<vmem>>, vector<8x1x128xf32>
    %20 = vector.shape_cast %19 : vector<8x1x128xf32> to vector<8x128xf32>
    %cst_21 = arith.constant dense<0.000000e+00> : vector<8x16xf32>
    %21 = tpu.matmul %20, %0, %cst_21 {dimension_numbers = #tpu.dot_dimension_numbers<[1], [0], [0], [1], [0, 0, 1, 1], [], []>} : vector<8x128xf32>, vector<128x16xf32>, vector<8x16xf32> -> vector<8x16xf32>
    %c0_22 = arith.constant 0 : index
    %c7 = arith.constant 7 : index
    %c0_23 = arith.constant 0 : index
    %22 = vector.load %arg1[%c0_22, %c7, %c0_23] : memref<8x8x128xf32, #tpu.memory_space<vmem>>, vector<8x1x128xf32>
    %23 = vector.shape_cast %22 : vector<8x1x128xf32> to vector<8x128xf32>
    %cst_24 = arith.constant dense<0.000000e+00> : vector<8x16xf32>
    %24 = tpu.matmul %23, %0, %cst_24 {dimension_numbers = #tpu.dot_dimension_numbers<[1], [0], [0], [1], [0, 0, 1, 1], [], []>} : vector<8x128xf32>, vector<128x16xf32>, vector<8x16xf32> -> vector<8x16xf32>
    %25 = tpu.concatenate %3, %6, %9, %12, %15, %18, %21, %24 in 1 : vector<8x16xf32>, vector<8x16xf32>, vector<8x16xf32>, vector<8x16xf32>, vector<8x16xf32>, vector<8x16xf32>, vector<8x16xf32>, vector<8x16xf32> -> vector<8x128xf32>
    %c0_25 = arith.constant 0 : index
    %c0_26 = arith.constant 0 : index
    %26 = vector.load %arg3[%c0_25, %c0_26] : memref<1x128xf32, #tpu.memory_space<vmem>>, vector<1x128xf32>
    %27 = vector.broadcast %26 : vector<1x128xf32> to vector<8x128xf32>
    %28 = arith.addf %25, %27 : vector<8x128xf32>
    %c0_27 = arith.constant 0 : index
    %c0_28 = arith.constant 0 : index
    %29 = vector.load %arg4[%c0_27, %c0_28] : memref<8x128xf32, #tpu.memory_space<vmem>>, vector<8x128xf32>
    tpu.vector_store %arg4[%c0_27, %c0_28], %28 {strides = array<i32>} : memref<8x128xf32, #tpu.memory_space<vmem>>, vector<8x128xf32>,
    return
  }
  func.func @transform_0(%arg0: i32) -> (i32, i32, i32) {
    %c0_i32 = arith.constant 0 : i32
    %c0_i32_0 = arith.constant 0 : i32
    %c0_i32_1 = arith.constant 0 : i32
    return %arg0, %c0_i32, %c0_i32_0 : i32, i32, i32
  }
  func.func @transform_1(%arg0: i32) -> (i32, i32) {
    %c0_i32 = arith.constant 0 : i32
    %c0_i32_0 = arith.constant 0 : i32
    %c0_i32_1 = arith.constant 0 : i32
    return %c0_i32, %c0_i32_0 : i32, i32
  }
  func.func @transform_2(%arg0: i32) -> (i32, i32) {
    %c0_i32 = arith.constant 0 : i32
    %c0_i32_0 = arith.constant 0 : i32
    %c0_i32_1 = arith.constant 0 : i32
    return %c0_i32, %c0_i32_0 : i32, i32
  }
  func.func @transform_3(%arg0: i32) -> (i32, i32) {
    %c0_i32 = arith.constant 0 : i32
    %c0_i32_0 = arith.constant 0 : i32
    return %arg0, %c0_i32 : i32, i32
  }
}

</mosaic_0001>

<llo_original>
// kernel: tpu_custom_call.1
$region0: #{tpu_custom_call.1}
  #allocation0 [shape = 'u32[]', space=smem, size = 0x4, offset = 0x4, fixed_abs, tag = 'smem constant byte address 0x4 - core index']
  #allocation1 [shape = 'u32[72,128]{1,0:T(1,128)}', space=vmem, size = 0x9000, scoped, tag = 'internal scratch']
  %s0 = inlined_call_operand.hbm [shape: f32[25,8,128], index: 0, kind: input, shape index: {}]
  %s1 = inlined_call_operand.vmem [shape: f32[128,16], index: 1, kind: input, shape index: {}]
  %s2 = inlined_call_operand.vmem [shape: f32[1,128], index: 2, kind: input, shape index: {}]
  %s3 = inlined_call_operand.hbm [shape: f32[24,128], index: 3, kind: output, shape index: {}]
  %s4 = sld [smem:[#allocation0]]
  $region49: #{tpu_custom_call.1} parent=0
    _
  %s6 = ssub.s32 1, %s4
  %s7 = scalar_select 0, %s6, %s4
  $region1: #{tpu_custom_call.1} parent=0
    #allocation2 [shape = 'u8[65536]{0}', space=vmem, size = 0x10000, scoped, tag = 'input window, operand 0']
    #allocation3 [shape = 's32[2]{0}', space=sflag, size = 0x8, scoped, tag = 'scoped memory for tpu_custom_call.1']
    #allocation4 [shape = 's32[2]{0}', space=sflag, size = 0x8, scoped, tag = 'scoped memory for tpu_custom_call.1']
    #allocation5 [shape = 'u8[8192]{0}', space=vmem, size = 0x2000, scoped, tag = 'output window, operand 0']
    %8 = vsyncpa [#allocation3], 0
    %s9 = scalar_lea.sflag [#allocation3], 1
    %10 = vsyncpa %s9, 0
    %11 = vsyncpa [#allocation4], 0
    %s12 = scalar_lea.sflag [#allocation4], 1
    %13 = vsyncpa %s12, 0
    loop: start=0, step=1, limit=5
    $region2: #{tpu_custom_call.1} parent=1 // loop_pre_header
      _
    $region3: #{tpu_custom_call.1} parent=1 // loop_header
      %s15 = sphi 0, %s19
      %p16 = scmp.ge.s32.totalorder %s15, 5
      %s25 = sphi 0, %s27
      %s28 = sphi 0, %s25
      %s29 = sphi 0, %s28
      %s45 = sphi 0, %s29
      %s49 = sphi 0, %s49
      %s51 = sphi 0, %s49
      %s52 = sphi 0, %s51
      %s66 = sphi 0, %s52
      %s70 = sphi 0, %s70
      %s72 = sphi 0, %s70
      %s73 = sphi 0, %s72
      %s87 = sphi 0, %s73
      %s93 = sphi 0, %s95
      %s96 = sphi 0, %s93
      %s97 = sphi 0, %s96
      %s113 = sphi 0, %s97
    $region4: #{tpu_custom_call.1} parent=1 // loop_header_branch
      %18 = sbr.rel (%p16) target = $region8
    $region5: #{tpu_custom_call.1} parent=1 // loop_body
      %s20 = ssub.s32 %s15, 1
      %s21 = ssub.s32 %s15, 2
      %s22 = sadd.s32 %s15, 1
      %s23 = ssub.s32 %s15, %s22
      %p24 = scmp.eq.s32.totalorder %s23, 0
      %s26 = sadd.s32 %s25, 1
      %s27 = scalar_select %p24, %s25, %s26
      %p30 = pneg %p24
      %p31 = scmp.eq.s32.totalorder %s15, 2
      %p32 = por %p30, %p31
      %p33 = scmp.ne.s32.totalorder %s25, %s28
      %p34 = scmp.eq.s32.totalorder %s15, 0
      %p35 = por %p33, %p34
      %p36 = scmp.ne.s32.totalorder %s25, %s28
      %p37 = scmp.eq.s32.totalorder %s20, 2
      %p38 = por %p36, %p37
      %p39 = scmp.ne.s32.totalorder %s28, %s29
      %p40 = scmp.eq.s32.totalorder %s20, 0
      %p41 = por %p39, %p40
      %p42 = scmp.ne.s32.totalorder %s28, %s29
      %p43 = scmp.eq.s32.totalorder %s21, 2
      %p44 = por %p42, %p43
      %p46 = scmp.ne.s32.totalorder %s29, %s45
      %p47 = scmp.eq.s32.totalorder %s21, 0
      %p48 = por %p46, %p47
      %s50 = sadd.s32 %s49, 1
      %p53 = scmp.eq.s32.totalorder %s15, 2
      %p54 = scmp.ne.s32.totalorder %s49, %s51
      %p55 = scmp.eq.s32.totalorder %s15, 0
      %p56 = por %p54, %p55
      %p57 = scmp.ne.s32.totalorder %s49, %s51
      %p58 = scmp.eq.s32.totalorder %s20, 2
      %p59 = por %p57, %p58
      %p60 = scmp.ne.s32.totalorder %s51, %s52
      %p61 = scmp.eq.s32.totalorder %s20, 0
      %p62 = por %p60, %p61
      %p63 = scmp.ne.s32.totalorder %s51, %s52
      %p64 = scmp.eq.s32.totalorder %s21, 2
      %p65 = por %p63, %p64
      %p67 = scmp.ne.s32.totalorder %s52, %s66
      %p68 = scmp.eq.s32.totalorder %s21, 0
      %p69 = por %p67, %p68
      %s71 = sadd.s32 %s70, 1
      %p74 = scmp.eq.s32.totalorder %s15, 2
      %p75 = scmp.ne.s32.totalorder %s70, %s72
      %p76 = scmp.eq.s32.totalorder %s15, 0
      %p77 = por %p75, %p76
      %p78 = scmp.ne.s32.totalorder %s70, %s72
      %p79 = scmp.eq.s32.totalorder %s20, 2
      %p80 = por %p78, %p79
      %p81 = scmp.ne.s32.totalorder %s72, %s73
      %p82 = scmp.eq.s32.totalorder %s20, 0
      %p83 = por %p81, %p82
      %p84 = scmp.ne.s32.totalorder %s72, %s73
      %p85 = scmp.eq.s32.totalorder %s21, 2
      %p86 = por %p84, %p85
      %p88 = scmp.ne.s32.totalorder %s73, %s87
      %p89 = scmp.eq.s32.totalorder %s21, 0
      %p90 = por %p88, %p89
      %s91 = ssub.s32 %s15, %s22
      %p92 = scmp.eq.s32.totalorder %s91, 0
      %s94 = sadd.s32 %s93, 1
      %s95 = scalar_select %p92, %s93, %s94
      %p98 = pneg %p92
      %p99 = scmp.eq.s32.totalorder %s15, 2
      %p100 = por %p98, %p99
      %p101 = scmp.ne.s32.totalorder %s93, %s96
      %p102 = scmp.eq.s32.totalorder %s15, 0
      %p103 = por %p101, %p102
      %p104 = scmp.ne.s32.totalorder %s93, %s96
      %p105 = scmp.eq.s32.totalorder %s20, 2
      %p106 = por %p104, %p105
      %p107 = scmp.ne.s32.totalorder %s96, %s97
      %p108 = scmp.eq.s32.totalorder %s20, 0
      %p109 = por %p107, %p108
      %p110 = scmp.ne.s32.totalorder %s96, %s97
      %p111 = scmp.eq.s32.totalorder %s21, 2
      %p112 = por %p110, %p111
      %p114 = scmp.ne.s32.totalorder %s97, %s113
      %p115 = scmp.eq.s32.totalorder %s21, 0
      %p116 = por %p114, %p115
      %p117 = scmp.le.s32.totalorder 1, %s15
      %p118 = scmp.lt.s32.totalorder %s15, 4
      %p119 = pnand %p117, %p118
      %p120 = pneg %p119
      // Predicated region
      $region9: #{tpu_custom_call.1} parent=5 // pred_check
        _
      $region10: #{tpu_custom_call.1} parent=5 // pred_check_branch
        %122 = sbr.rel (%p119) target = $region12
      $region11: #{tpu_custom_call.1} parent=5 // pred_region
        %s123 = ssub.s32 %s15, 1
        // Predicated region
        $region13: #{tpu_custom_call.1} parent=11 // pred_check
          %p124 = pneg %p62
        $region14: #{tpu_custom_call.1} parent=11 // pred_check_branch
          %126 = sbr.rel (%p124) target = $region16
        $region15: #{tpu_custom_call.1} parent=11 // pred_region
          _
        $region16: #{tpu_custom_call.1} parent=11 // pred_fallthru
          _
        // Predicated region
        $region17: #{tpu_custom_call.1} parent=11 // pred_check
          %p127 = pneg %p83
        $region18: #{tpu_custom_call.1} parent=11 // pred_check_branch
          %129 = sbr.rel (%p127) target = $region20
        $region19: #{tpu_custom_call.1} parent=11 // pred_region
          _
        $region20: #{tpu_custom_call.1} parent=11 // pred_fallthru
          _
      $region12: #{tpu_custom_call.1} parent=5 // pred_fallthru
        _
      %p130 = scmp.lt.s32.totalorder %s15, 3
      // Predicated region
      $region21: #{tpu_custom_call.1} parent=5 // pred_check
        %p131 = pneg %p130
      $region22: #{tpu_custom_call.1} parent=5 // pred_check_branch
        %133 = sbr.rel (%p131) target = $region24
      $region23: #{tpu_custom_call.1} parent=5 // pred_region
        // Predicated region
        $region25: #{tpu_custom_call.1} parent=23 // pred_check
          %p134 = pneg %p35
        $region26: #{tpu_custom_call.1} parent=23 // pred_check_branch
          %136 = sbr.rel (%p134) target = $region28
        $region27: #{tpu_custom_call.1} parent=23 // pred_region
          %s137 = sand.u32 %s25, 1
          %s138 = scalar_lea.sflag [#allocation3], %s137
          %s139 = sand.u32 %s25, 1
          %s140 = smul.addr %s139, 64
          %s141 = scalar_lea.vmem [#allocation2], %s140
          %s142 = smul.u32 8, %s15
          %s143 = ssub.s32 25, %s142
          %p144 = scmp.lt.s32.totalorder %s143, 8
          %s145 = scalar_select %p144, %s143, 8
          %s146 = smul.u32 8, %s145
          %s147 = ssub.s32 64, %s146
          %s148 = sshll.u32 %s147, 4
          %149 = vsyncadd %s138, %s148
          %p150 = scmp.ne.s32.totalorder 0, %s146
          %s151 = smul.addr %s142, 8
          %s152 = scalar_lea.hbm %s0, %s151
          %s153 = smul.u32 8, %s145
          %s154 = sshll.u32 %s152, 4
          %s155 = int_to_ptr.hbm [resolvable:$true] %s154
          %s156 = sshll.u32 %s141, 4
          %s157 = int_to_ptr.vmem [resolvable:$true] %s156
          %s158 = sshll.u32 %s153, 4
          %162 = dma.hbm_to_vmem [thread:$0]  (%p150), %s155, %s158, %s157, %s138, 128, 128, 8
        $region28: #{tpu_custom_call.1} parent=23 // pred_fallthru
          _
      $region24: #{tpu_custom_call.1} parent=5 // pred_fallthru
        _
      %p163 = scmp.le.s32.totalorder 1, %s15
      %p164 = scmp.lt.s32.totalorder %s15, 4
      %p165 = pnand %p163, %p164
      %p166 = pneg %p165
      // Predicated region
      $region29: #{tpu_custom_call.1} parent=5 // pred_check
        _
      $region30: #{tpu_custom_call.1} parent=5 // pred_check_branch
        %168 = sbr.rel (%p165) target = $region32
      $region31: #{tpu_custom_call.1} parent=5 // pred_region
        %s169 = ssub.s32 %s15, 1
        %s170 = sand.u32 %s28, 1
        %s171 = scalar_lea.sflag [#allocation3], %s170
        %s172 = sand.u32 %s28, 1
        %s173 = smul.addr %s172, 64
        %s174 = scalar_lea.vmem [#allocation2], %s173
        // Predicated region
        $region33: #{tpu_custom_call.1} parent=31 // pred_check
          %p175 = pneg %p41
        $region34: #{tpu_custom_call.1} parent=31 // pred_check_branch
          %177 = sbr.rel (%p175) target = $region36
        $region35: #{tpu_custom_call.1} parent=31 // pred_region
          %179 = dma.done %s171, 1024
        $region36: #{tpu_custom_call.1} parent=31 // pred_fallthru
          _
        %s180 = sand.u32 %s28, 1
        %s181 = scalar_lea.sflag [#allocation3], %s180
        %s182 = sand.u32 %s28, 1
        %s183 = smul.addr %s182, 64
        %s184 = scalar_lea.vmem [#allocation2], %s183
        %p185 = pneg %p41
        %p186 = pneg %p38
        %p187 = pneg %p62
        %p188 = pneg %p59
        %p189 = pneg %p83
        %p190 = pneg %p80
        %p191 = pneg %p109
        %p192 = pneg %p106
        %s193 = sand.u32 %s96, 1
        %s194 = scalar_lea.sflag [#allocation4], %s193
        %s195 = sand.u32 %s96, 1
        %s196 = smul.addr %s195, 8
        %s197 = scalar_lea.vmem [#allocation5], %s196
        %s198 = smul.u32 8, %s20
        %s199 = ssub.s32 25, %s198
        %p200 = scmp.lt.s32.totalorder %s199, 8
        %s201 = scalar_select %p200, %s199, 8
        %s202 = smul.u32 8, %s201
        %v203 = vld [vmem:[%s1] sm:$0xff]
        %v204 = vld [vmem:[%s1 + $0x8] sm:$0xff]
        %v205 = vld [vmem:[%s1 + $0x10] sm:$0xff]
        %v206 = vld [vmem:[%s1 + $0x18] sm:$0xff]
        %v207 = vld [vmem:[%s1 + $0x20] sm:$0xff]
        %v208 = vld [vmem:[%s1 + $0x28] sm:$0xff]
        %v209 = vld [vmem:[%s1 + $0x30] sm:$0xff]
        %v210 = vld [vmem:[%s1 + $0x38] sm:$0xff]
        %v211 = vld [vmem:[%s1 + $0x40] sm:$0xff]
        %v212 = vld [vmem:[%s1 + $0x48] sm:$0xff]
        %v213 = vld [vmem:[%s1 + $0x50] sm:$0xff]
        %v214 = vld [vmem:[%s1 + $0x58] sm:$0xff]
        %v215 = vld [vmem:[%s1 + $0x60] sm:$0xff]
        %v216 = vld [vmem:[%s1 + $0x68] sm:$0xff]
        %v217 = vld [vmem:[%s1 + $0x70] sm:$0xff]
        %v218 = vld [vmem:[%s1 + $0x78] sm:$0xff]
        %v219 = vld [vmem:[%s174] sm:$0x1]
        %v220 = vld [vmem:[%s174 + $0x8] sm:$0x1]
        %v221 = vld [vmem:[%s174 + $0x10] sm:$0x1]
        %v222 = vld [vmem:[%s174 + $0x18] sm:$0x1]
        %v223 = vld [vmem:[%s174 + $0x20] sm:$0x1]
        %v224 = vld [vmem:[%s174 + $0x28] sm:$0x1]
        %v225 = vld [vmem:[%s174 + $0x30] sm:$0x1]
        %v226 = vld [vmem:[%s174 + $0x38] sm:$0x1]
        %v235 = vrot.slane %v220, 7
        %vm236 = vcmask 1041409
        %v237 = vsel %vm236, %v235, %v219
        %v238 = vrot.slane %v221, 6
        %vm239 = vcmask 1042434
        %v240 = vsel %vm239, %v238, %v237
        %v241 = vrot.slane %v222, 5
        %vm242 = vcmask 1043459
        %v243 = vsel %vm242, %v241, %v240
        %v244 = vrot.slane %v223, 4
        %vm245 = vcmask 1044484
        %v246 = vsel %vm245, %v244, %v243
        %v247 = vrot.slane %v224, 3
        %vm248 = vcmask 1045509
        %v249 = vsel %vm248, %v247, %v246
        %v250 = vrot.slane %v225, 2
        %vm251 = vcmask 1046534
        %v252 = vsel %vm251, %v250, %v249
        %v253 = vrot.slane %v226, 1
        %vm254 = vcmask 1047559
        %v255 = vsel %vm254, %v253, %v252
        %257 = vmatpush.msra.mxu0 %v218
        %258 = vmatpush.msra.mxu0 %v217
        %259 = vmatpush.msra.mxu0 %v216
        %260 = vmatpush.msra.mxu0 %v215
        %261 = vmatpush.msra.mxu0 %v214
        %262 = vmatpush.msra.mxu0 %v213
        %263 = vmatpush.msra.mxu0 %v212
        %264 = vmatpush.msra.mxu0 %v211
        %265 = vmatpush.msra.mxu0 %v210
        %266 = vmatpush.msra.mxu0 %v209
        %267 = vmatpush.msra.mxu0 %v208
        %268 = vmatpush.msra.mxu0 %v207
        %269 = vmatpush.msra.mxu0 %v206
        %270 = vmatpush.msra.mxu0 %v205
        %271 = vmatpush.msra.mxu0 %v204
        %272 = vmatpush.msra.mxu0 %v203
        %273 = vmatmul.f32.gmra.mxu0 %v255
        %v274 = vpop.f32.mrf.mxu0
        %v275 = vadd.f32 0.0, %v274
        %276 = vdwg.mxu0
        %v277 = vld [vmem:[%s174 + $0x1] sm:$0x1]
        %v278 = vld [vmem:[%s174 + $0x9] sm:$0x1]
        %v279 = vld [vmem:[%s174 + $0x11] sm:$0x1]
        %v280 = vld [vmem:[%s174 + $0x19] sm:$0x1]
        %v281 = vld [vmem:[%s174 + $0x21] sm:$0x1]
        %v282 = vld [vmem:[%s174 + $0x29] sm:$0x1]
        %v283 = vld [vmem:[%s174 + $0x31] sm:$0x1]
        %v284 = vld [vmem:[%s174 + $0x39] sm:$0x1]
        %v293 = vrot.slane %v278, 7
        %v294 = vsel %vm236, %v293, %v277
        %v295 = vrot.slane %v279, 6
        %v296 = vsel %vm239, %v295, %v294
        %v297 = vrot.slane %v280, 5
        %v298 = vsel %vm242, %v297, %v296
        %v299 = vrot.slane %v281, 4
        %v300 = vsel %vm245, %v299, %v298
        %v301 = vrot.slane %v282, 3
        %v302 = vsel %vm248, %v301, %v300
        %v303 = vrot.slane %v283, 2
        %v304 = vsel %vm251, %v303, %v302
        %v305 = vrot.slane %v284, 1
        %v306 = vsel %vm254, %v305, %v304
        %308 = vmatpush.msra.mxu0 %v218
        %309 = vmatpush.msra.mxu0 %v217
        %310 = vmatpush.msra.mxu0 %v216
        %311 = vmatpush.msra.mxu0 %v215
        %312 = vmatpush.msra.mxu0 %v214
        %313 = vmatpush.msra.mxu0 %v213
        %314 = vmatpush.msra.mxu0 %v212
        %315 = vmatpush.msra.mxu0 %v211
        %316 = vmatpush.msra.mxu0 %v210
        %317 = vmatpush.msra.mxu0 %v209
        %318 = vmatpush.msra.mxu0 %v208
        %319 = vmatpush.msra.mxu0 %v207
        %320 = vmatpush.msra.mxu0 %v206
        %321 = vmatpush.msra.mxu0 %v205
        %322 = vmatpush.msra.mxu0 %v204
        %323 = vmatpush.msra.mxu0 %v203
        %324 = vmatmul.f32.gmra.mxu0 %v306
        %v325 = vpop.f32.mrf.mxu0
        %v326 = vadd.f32 0.0, %v325
        %327 = vdwg.mxu0
        %v328 = vld [vmem:[%s174 + $0x2] sm:$0x1]
        %v329 = vld [vmem:[%s174 + $0xa] sm:$0x1]
        %v330 = vld [vmem:[%s174 + $0x12] sm:$0x1]
        %v331 = vld [vmem:[%s174 + $0x1a] sm:$0x1]
        %v332 = vld [vmem:[%s174 + $0x22] sm:$0x1]
        %v333 = vld [vmem:[%s174 + $0x2a] sm:$0x1]
        %v334 = vld [vmem:[%s174 + $0x32] sm:$0x1]
        %v335 = vld [vmem:[%s174 + $0x3a] sm:$0x1]
        %v344 = vrot.slane %v329, 7
        %v345 = vsel %vm236, %v344, %v328
        %v346 = vrot.slane %v330, 6
        %v347 = vsel %vm239, %v346, %v345
        %v348 = vrot.slane %v331, 5
        %v349 = vsel %vm242, %v348, %v347
        %v350 = vrot.slane %v332, 4
        %v351 = vsel %vm245, %v350, %v349
        %v352 = vrot.slane %v333, 3
        %v353 = vsel %vm248, %v352, %v351
        %v354 = vrot.slane %v334, 2
        %v355 = vsel %vm251, %v354, %v353
        %v356 = vrot.slane %v335, 1
        %v357 = vsel %vm254, %v356, %v355
        %359 = vmatpush.msra.mxu0 %v218
        %360 = vmatpush.msra.mxu0 %v217
        %361 = vmatpush.msra.mxu0 %v216
        %362 = vmatpush.msra.mxu0 %v215
        %363 = vmatpush.msra.mxu0 %v214
        %364 = vmatpush.msra.mxu0 %v213
        %365 = vmatpush.msra.mxu0 %v212
        %366 = vmatpush.msra.mxu0 %v211
        %367 = vmatpush.msra.mxu0 %v210
        %368 = vmatpush.msra.mxu0 %v209
        %369 = vmatpush.msra.mxu0 %v208
        %370 = vmatpush.msra.mxu0 %v207
        %371 = vmatpush.msra.mxu0 %v206
        %372 = vmatpush.msra.mxu0 %v205
        %373 = vmatpush.msra.mxu0 %v204
        %374 = vmatpush.msra.mxu0 %v203
        %375 = vmatmul.f32.gmra.mxu0 %v357
        %v376 = vpop.f32.mrf.mxu0
        %v377 = vadd.f32 0.0, %v376
        %378 = vdwg.mxu0
        %v379 = vld [vmem:[%s174 + $0x3] sm:$0x1]
        %v380 = vld [vmem:[%s174 + $0xb] sm:$0x1]
        %v381 = vld [vmem:[%s174 + $0x13] sm:$0x1]
        %v382 = vld [vmem:[%s174 + $0x1b] sm:$0x1]
        %v383 = vld [vmem:[%s174 + $0x23] sm:$0x1]
        %v384 = vld [vmem:[%s174 + $0x2b] sm:$0x1]
        %v385 = vld [vmem:[%s174 + $0x33] sm:$0x1]
        %v386 = vld [vmem:[%s174 + $0x3b] sm:$0x1]
        %v395 = vrot.slane %v380, 7
        %v396 = vsel %vm236, %v395, %v379
        %v397 = vrot.slane %v381, 6
        %v398 = vsel %vm239, %v397, %v396
        %v399 = vrot.slane %v382, 5
        %v400 = vsel %vm242, %v399, %v398
        %v401 = vrot.slane %v383, 4
        %v402 = vsel %vm245, %v401, %v400
        %v403 = vrot.slane %v384, 3
        %v404 = vsel %vm248, %v403, %v402
        %v405 = vrot.slane %v385, 2
        %v406 = vsel %vm251, %v405, %v404
        %v407 = vrot.slane %v386, 1
        %v408 = vsel %vm254, %v407, %v406
        %410 = vmatpush.msra.mxu0 %v218
        %411 = vmatpush.msra.mxu0 %v217
        %412 = vmatpush.msra.mxu0 %v216
        %413 = vmatpush.msra.mxu0 %v215
        %414 = vmatpush.msra.mxu0 %v214
        %415 = vmatpush.msra.mxu0 %v213
        %416 = vmatpush.msra.mxu0 %v212
        %417 = vmatpush.msra.mxu0 %v211
        %418 = vmatpush.msra.mxu0 %v210
        %419 = vmatpush.msra.mxu0 %v209
        %420 = vmatpush.msra.mxu0 %v208
        %421 = vmatpush.msra.mxu0 %v207
        %422 = vmatpush.msra.mxu0 %v206
        %423 = vmatpush.msra.mxu0 %v205
        %424 = vmatpush.msra.mxu0 %v204
        %425 = vmatpush.msra.mxu0 %v203
        %426 = vmatmul.f32.gmra.mxu0 %v408
        %v427 = vpop.f32.mrf.mxu0
        %v428 = vadd.f32 0.0, %v427
        %429 = vdwg.mxu0
        %v430 = vld [vmem:[%s174 + $0x4] sm:$0x1]
        %v431 = vld [vmem:[%s174 + $0xc] sm:$0x1]
        %v432 = vld [vmem:[%s174 + $0x14] sm:$0x1]
        %v433 = vld [vmem:[%s174 + $0x1c] sm:$0x1]
        %v434 = vld [vmem:[%s174 + $0x24] sm:$0x1]
        %v435 = vld [vmem:[%s174 + $0x2c] sm:$0x1]
        %v436 = vld [vmem:[%s174 + $0x34] sm:$0x1]
        %v437 = vld [vmem:[%s174 + $0x3c] sm:$0x1]
        %v446 = vrot.slane %v431, 7
        %v447 = vsel %vm236, %v446, %v430
        %v448 = vrot.slane %v432, 6
        %v449 = vsel %vm239, %v448, %v447
        %v450 = vrot.slane %v433, 5
        %v451 = vsel %vm242, %v450, %v449
        %v452 = vrot.slane %v434, 4
        %v453 = vsel %vm245, %v452, %v451
        %v454 = vrot.slane %v435, 3
        %v455 = vsel %vm248, %v454, %v453
        %v456 = vrot.slane %v436, 2
        %v457 = vsel %vm251, %v456, %v455
        %v458 = vrot.slane %v437, 1
        %v459 = vsel %vm254, %v458, %v457
        %461 = vmatpush.msra.mxu0 %v218
        %462 = vmatpush.msra.mxu0 %v217
        %463 = vmatpush.msra.mxu0 %v216
        %464 = vmatpush.msra.mxu0 %v215
        %465 = vmatpush.msra.mxu0 %v214
        %466 = vmatpush.msra.mxu0 %v213
        %467 = vmatpush.msra.mxu0 %v212
        %468 = vmatpush.msra.mxu0 %v211
        %469 = vmatpush.msra.mxu0 %v210
        %470 = vmatpush.msra.mxu0 %v209
        %471 = vmatpush.msra.mxu0 %v208
        %472 = vmatpush.msra.mxu0 %v207
        %473 = vmatpush.msra.mxu0 %v206
        %474 = vmatpush.msra.mxu0 %v205
        %475 = vmatpush.msra.mxu0 %v204
        %476 = vmatpush.msra.mxu0 %v203
        %477 = vmatmul.f32.gmra.mxu0 %v459
        %v478 = vpop.f32.mrf.mxu0
        %v479 = vadd.f32 0.0, %v478
        %480 = vdwg.mxu0
        %v481 = vld [vmem:[%s174 + $0x5] sm:$0x1]
        %v482 = vld [vmem:[%s174 + $0xd] sm:$0x1]
        %v483 = vld [vmem:[%s174 + $0x15] sm:$0x1]
        %v484 = vld [vmem:[%s174 + $0x1d] sm:$0x1]
        %v485 = vld [vmem:[%s174 + $0x25] sm:$0x1]
        %v486 = vld [vmem:[%s174 + $0x2d] sm:$0x1]
        %v487 = vld [vmem:[%s174 + $0x35] sm:$0x1]
        %v488 = vld [vmem:[%s174 + $0x3d] sm:$0x1]
        %v497 = vrot.slane %v482, 7
        %v498 = vsel %vm236, %v497, %v481
        %v499 = vrot.slane %v483, 6
        %v500 = vsel %vm239, %v499, %v498
        %v501 = vrot.slane %v484, 5
        %v502 = vsel %vm242, %v501, %v500
        %v503 = vrot.slane %v485, 4
        %v504 = vsel %vm245, %v503, %v502
        %v505 = vrot.slane %v486, 3
        %v506 = vsel %vm248, %v505, %v504
        %v507 = vrot.slane %v487, 2
        %v508 = vsel %vm251, %v507, %v506
        %v509 = vrot.slane %v488, 1
        %v510 = vsel %vm254, %v509, %v508
        %512 = vmatpush.msra.mxu0 %v218
        %513 = vmatpush.msra.mxu0 %v217
        %514 = vmatpush.msra.mxu0 %v216
        %515 = vmatpush.msra.mxu0 %v215
        %516 = vmatpush.msra.mxu0 %v214
        %517 = vmatpush.msra.mxu0 %v213
        %518 = vmatpush.msra.mxu0 %v212
        %519 = vmatpush.msra.mxu0 %v211
        %520 = vmatpush.msra.mxu0 %v210
        %521 = vmatpush.msra.mxu0 %v209
        %522 = vmatpush.msra.mxu0 %v208
        %523 = vmatpush.msra.mxu0 %v207
        %524 = vmatpush.msra.mxu0 %v206
        %525 = vmatpush.msra.mxu0 %v205
        %526 = vmatpush.msra.mxu0 %v204
        %527 = vmatpush.msra.mxu0 %v203
        %528 = vmatmul.f32.gmra.mxu0 %v510
        %v529 = vpop.f32.mrf.mxu0
        %v530 = vadd.f32 0.0, %v529
        %531 = vdwg.mxu0
        %v532 = vld [vmem:[%s174 + $0x6] sm:$0x1]
        %v533 = vld [vmem:[%s174 + $0xe] sm:$0x1]
        %v534 = vld [vmem:[%s174 + $0x16] sm:$0x1]
        %v535 = vld [vmem:[%s174 + $0x1e] sm:$0x1]
        %v536 = vld [vmem:[%s174 + $0x26] sm:$0x1]
        %v537 = vld [vmem:[%s174 + $0x2e] sm:$0x1]
        %v538 = vld [vmem:[%s174 + $0x36] sm:$0x1]
        %v539 = vld [vmem:[%s174 + $0x3e] sm:$0x1]
        %v548 = vrot.slane %v533, 7
        %v549 = vsel %vm236, %v548, %v532
        %v550 = vrot.slane %v534, 6
        %v551 = vsel %vm239, %v550, %v549
        %v552 = vrot.slane %v535, 5
        %v553 = vsel %vm242, %v552, %v551
        %v554 = vrot.slane %v536, 4
        %v555 = vsel %vm245, %v554, %v553
        %v556 = vrot.slane %v537, 3
        %v557 = vsel %vm248, %v556, %v555
        %v558 = vrot.slane %v538, 2
        %v559 = vsel %vm251, %v558, %v557
        %v560 = vrot.slane %v539, 1
        %v561 = vsel %vm254, %v560, %v559
        %563 = vmatpush.msra.mxu0 %v218
        %564 = vmatpush.msra.mxu0 %v217
        %565 = vmatpush.msra.mxu0 %v216
        %566 = vmatpush.msra.mxu0 %v215
        %567 = vmatpush.msra.mxu0 %v214
        %568 = vmatpush.msra.mxu0 %v213
        %569 = vmatpush.msra.mxu0 %v212
        %570 = vmatpush.msra.mxu0 %v211
        %571 = vmatpush.msra.mxu0 %v210
        %572 = vmatpush.msra.mxu0 %v209
        %573 = vmatpush.msra.mxu0 %v208
        %574 = vmatpush.msra.mxu0 %v207
        %575 = vmatpush.msra.mxu0 %v206
        %576 = vmatpush.msra.mxu0 %v205
        %577 = vmatpush.msra.mxu0 %v204
        %578 = vmatpush.msra.mxu0 %v203
        %579 = vmatmul.f32.gmra.mxu0 %v561
        %v580 = vpop.f32.mrf.mxu0
        %v581 = vadd.f32 0.0, %v580
        %582 = vdwg.mxu0
        %v583 = vld [vmem:[%s174 + $0x7] sm:$0x1]
        %v584 = vld [vmem:[%s174 + $0xf] sm:$0x1]
        %v585 = vld [vmem:[%s174 + $0x17] sm:$0x1]
        %v586 = vld [vmem:[%s174 + $0x1f] sm:$0x1]
        %v587 = vld [vmem:[%s174 + $0x27] sm:$0x1]
        %v588 = vld [vmem:[%s174 + $0x2f] sm:$0x1]
        %v589 = vld [vmem:[%s174 + $0x37] sm:$0x1]
        %v590 = vld [vmem:[%s174 + $0x3f] sm:$0x1]
        %v599 = vrot.slane %v584, 7
        %v600 = vsel %vm236, %v599, %v583
        %v601 = vrot.slane %v585, 6
        %v602 = vsel %vm239, %v601, %v600
        %v603 = vrot.slane %v586, 5
        %v604 = vsel %vm242, %v603, %v602
        %v605 = vrot.slane %v587, 4
        %v606 = vsel %vm245, %v605, %v604
        %v607 = vrot.slane %v588, 3
        %v608 = vsel %vm248, %v607, %v606
        %v609 = vrot.slane %v589, 2
        %v610 = vsel %vm251, %v609, %v608
        %v611 = vrot.slane %v590, 1
        %v612 = vsel %vm254, %v611, %v610
        %614 = vmatpush.msra.mxu0 %v218
        %615 = vmatpush.msra.mxu0 %v217
        %616 = vmatpush.msra.mxu0 %v216
        %617 = vmatpush.msra.mxu0 %v215
        %618 = vmatpush.msra.mxu0 %v214
        %619 = vmatpush.msra.mxu0 %v213
        %620 = vmatpush.msra.mxu0 %v212
        %621 = vmatpush.msra.mxu0 %v211
        %622 = vmatpush.msra.mxu0 %v210
        %623 = vmatpush.msra.mxu0 %v209
        %624 = vmatpush.msra.mxu0 %v208
        %625 = vmatpush.msra.mxu0 %v207
        %626 = vmatpush.msra.mxu0 %v206
        %627 = vmatpush.msra.mxu0 %v205
        %628 = vmatpush.msra.mxu0 %v204
        %629 = vmatpush.msra.mxu0 %v203
        %630 = vmatmul.f32.gmra.mxu0 %v612
        %v631 = vpop.f32.mrf.mxu0
        %v632 = vadd.f32 0.0, %v631
        %633 = vdwg.mxu0
        %635 = vrot.lane.b32.xlu0 %v326, 16
        %v636 = vpop.permute.xlu0 %635
        %639 = vrot.lane.b32.xlu0 %v377, 32
        %v640 = vpop.permute.xlu0 %639
        %643 = vrot.lane.b32.xlu0 %v428, 48
        %v644 = vpop.permute.xlu0 %643
        %647 = vrot.lane.b32.xlu0 %v479, 64
        %v648 = vpop.permute.xlu0 %647
        %651 = vrot.lane.b32.xlu0 %v530, 80
        %v652 = vpop.permute.xlu0 %651
        %655 = vrot.lane.b32.xlu0 %v581, 96
        %v656 = vpop.permute.xlu0 %655
        %659 = vrot.lane.b32.xlu0 %v632, 112
        %v660 = vpop.permute.xlu0 %659
        %vm662 = vcmask 130048
        %v663 = vsel %vm662, %v275, %v636
        %vm664 = vcmask 261120
        %v665 = vsel %vm664, %v663, %v640
        %vm666 = vcmask 392192
        %v667 = vsel %vm666, %v665, %v644
        %vm668 = vcmask 523264
        %v669 = vsel %vm668, %v667, %v648
        %vm670 = vcmask 654336
        %v671 = vsel %vm670, %v669, %v652
        %vm672 = vcmask 785408
        %v673 = vsel %vm672, %v671, %v656
        %vm674 = vcmask 916480
        %v675 = vsel %vm674, %v673, %v660
        %v676 = vld [vmem:[%s2] sm:$0x1]
        %v678 = vperm.slane %v676, 0
        %v680 = vadd.f32 %v675, %v678
        %681 = vst [vmem:[%s197] sm:$0xff] %v680
        %s682 = sand.u32 %s96, 1
        %s683 = scalar_lea.sflag [#allocation4], %s682
        %s684 = sand.u32 %s96, 1
        %s685 = smul.addr %s684, 8
        %s686 = scalar_lea.vmem [#allocation5], %s685
        // Predicated region
        $region37: #{tpu_custom_call.1} parent=31 // pred_check
          %p687 = pneg %p106
        $region38: #{tpu_custom_call.1} parent=31 // pred_check_branch
          %689 = sbr.rel (%p687) target = $region40
        $region39: #{tpu_custom_call.1} parent=31 // pred_region
          %691 = vsyncadd %s683, 0
          %s692 = smul.addr %s20, 8
          %s693 = scalar_lea.hbm %s3, %s692
          %s695 = sshll.u32 %s686, 4
          %s696 = int_to_ptr.vmem [resolvable:$true] %s695
          %s697 = sshll.u32 %s693, 4
          %s698 = int_to_ptr.hbm [resolvable:$true] %s697
          %700 = dma.vmem_to_hbm [thread:$0]  %s696, 128, %s698, %s683
        $region40: #{tpu_custom_call.1} parent=31 // pred_fallthru
          _
      $region32: #{tpu_custom_call.1} parent=5 // pred_fallthru
        _
      %p701 = scmp.le.s32.totalorder 2, %s15
      // Predicated region
      $region41: #{tpu_custom_call.1} parent=5 // pred_check
        %p702 = pneg %p701
      $region42: #{tpu_custom_call.1} parent=5 // pred_check_branch
        %704 = sbr.rel (%p702) target = $region44
      $region43: #{tpu_custom_call.1} parent=5 // pred_region
        %s705 = ssub.s32 %s15, 2
        // Predicated region
        $region45: #{tpu_custom_call.1} parent=43 // pred_check
          %p706 = pneg %p112
        $region46: #{tpu_custom_call.1} parent=43 // pred_check_branch
          %708 = sbr.rel (%p706) target = $region48
        $region47: #{tpu_custom_call.1} parent=43 // pred_region
          %s709 = sand.u32 %s97, 1
          %s710 = scalar_lea.sflag [#allocation4], %s709
          %s711 = sand.u32 %s97, 1
          %s712 = smul.addr %s711, 8
          %s713 = scalar_lea.vmem [#allocation5], %s712
          %715 = dma.done %s710, 128
        $region48: #{tpu_custom_call.1} parent=43 // pred_fallthru
          _
      $region44: #{tpu_custom_call.1} parent=5 // pred_fallthru
        _
    $region6: #{tpu_custom_call.1} parent=1 // loop_footer
      %s19 = sadd.s32 1, %s15
    $region7: #{tpu_custom_call.1} parent=1 // loop_footer_branch
      %14 = sbr.rel target = $region3
    $region8: #{tpu_custom_call.1} parent=1 // loop_exit
      _
    %716 = vsyncpa [#allocation3], 1
    %s717 = scalar_lea.sflag [#allocation3], 1
    %718 = vsyncpa %s717, 1
    %719 = vsyncpa [#allocation4], 1
    %s720 = scalar_lea.sflag [#allocation4], 1
    %721 = vsyncpa %s720, 1

</llo_original>
